<compile_context>
chip_gen: v6e
topology: v6e:2x2x1
jax: 0.10.0
libtpu: 0.0.40
codegen_flags: <defaults>
</compile_context>

<pallas_src>
import jax
import jax.numpy as jnp
from jax.experimental import pallas as pl
from jax.experimental.pallas import tpu as pltpu


def _unnormalize_kernel(scale_ref, shift_ref, x_ref, o_ref):
    # scale/shift: (row_tile, 1) f32 blocks; one broadcast FMA over the tile.
    x = x_ref[...].astype(jnp.float32)
    o_ref[...] = (x * scale_ref[...] + shift_ref[...]).astype(o_ref.dtype)


def unnormalize(x, mean, std, *, target_tile_bytes=4 * 1024 * 1024,
                min_pallas_bytes=256 * 1024, donate_x=False):
    """x: (N, C, H, W); mean, std: (C,). Returns x * std[c] + mean[c]."""
    N, C, H, W = x.shape
    rows, cols = N * C, H * W
    itemsize = jnp.dtype(x.dtype).itemsize
    total_bytes = rows * cols * itemsize

    # Small-input / narrow-lane fallback: fixed pallas_call overhead dominates
    # tiny tensors, and cols < 128 would force lane-sparse masked stores.
    if total_bytes < min_pallas_bytes or cols < 128:
        mean_b = mean.astype(x.dtype).reshape(1, C, 1, 1)
        std_b = std.astype(x.dtype).reshape(1, C, 1, 1)
        return x * std_b + mean_b

    # Lane-dense 2D view; row index = n*C + c, so per-row scale/shift is
    # std/mean tiled N times, kept in f32 for the in-kernel FMA.
    x2 = x.reshape(rows, cols)
    scale = jnp.tile(std.astype(jnp.float32), N).reshape(rows, 1)
    shift = jnp.tile(mean.astype(jnp.float32), N).reshape(rows, 1)

    # Sublane packing for the input dtype: f32 = 8 rows/vreg, bf16 = 16, int8 = 32.
    sub = 8 * max(1, 4 // itemsize)

    # --- Joint tile sizing: tile bytes never exceed target_tile_bytes. Prefer
    # wide-and-short tiles so lane-padded (row_tile, 1) scale/shift stay small.
    if cols * itemsize * sub <= target_tile_bytes:
        col_tile = cols                                    # full width
    else:
        # Shrink column tile (multiple of 128) until `sub` rows fit the budget.
        col_tile = max(128, (target_tile_bytes // (sub * itemsize) // 128) * 128)

    max_rows = max(1, target_tile_bytes // (col_tile * itemsize))
    row_cap = 4096          # bounds lane-padded scale/shift VMEM (~8 MiB worst case)
    if rows <= row_cap and max_rows >= rows:
        row_tile = rows                                    # full extent
    else:
        row_tile = max(sub, (min(max_rows, row_cap) // sub) * sub)

    # v7x has two TensorCores: give the "parallel" row axis >= 2 steps when the
    # tensor is big enough to benefit from both cores streaming HBM.
    if pl.cdiv(rows, row_tile) == 1 and rows >= 2 * sub and total_bytes >= (1 << 20):
        row_tile = ((pl.cdiv(rows, 2) + sub - 1) // sub) * sub

    grid = (pl.cdiv(rows, row_tile), pl.cdiv(cols, col_tile))

    # Row axis parallel (contiguous row bands per core); column axis only needs
    # to be parallel when it is the sole source of multi-step work.
    col_sem = "parallel" if grid[0] == 1 else "arbitrary"

    extra_kwargs = {}
    if donate_x:
        extra_kwargs["input_output_aliases"] = {2: 0}   # out2 reuses x2's HBM buffer

    out2 = pl.pallas_call(
        _unnormalize_kernel,
        out_shape=jax.ShapeDtypeStruct((rows, cols), x.dtype),
        grid=grid,
        in_specs=[
            pl.BlockSpec((row_tile, 1), lambda i, j: (i, 0)),         # scale
            pl.BlockSpec((row_tile, 1), lambda i, j: (i, 0)),         # shift
            pl.BlockSpec((row_tile, col_tile), lambda i, j: (i, j)),  # x
        ],
        out_specs=pl.BlockSpec((row_tile, col_tile), lambda i, j: (i, j)),
        compiler_params=pltpu.CompilerParams(
            dimension_semantics=("parallel", col_sem),
            # Worst case: 4 x ~4 MiB x/out pipeline buffers + <= ~8 MiB of
            # lane-padded scale/shift blocks. 32 MiB raises v5e's 16 MiB
            # scoped default and stays well under v7x's 64 MiB physical VMEM.
            vmem_limit_bytes=32 * 1024 * 1024,
        ),
        **extra_kwargs,
    )(scale, shift, x2)

    return out2.reshape(N, C, H, W)


if __name__ == "__main__":
    key = jax.random.PRNGKey(0)

    # Module __init__ implies 3-channel mean/std reshaped to (1, 3, 1, 1).
    mean = jnp.array([0.485, 0.456, 0.406], dtype=jnp.float32)
    std = jnp.array([0.229, 0.224, 0.225], dtype=jnp.float32)

    # Small NCHW input consistent with the forward: batch=2, C=3, 16x16 spatial.
    x = jax.random.normal(key, (2, 3, 16, 16), dtype=jnp.float32)

    # min_pallas_bytes=0 forces the Pallas path even for this tiny demo tensor
    # (the production default would route it to the XLA elementwise fallback).
    out = unnormalize(x, mean, std, min_pallas_bytes=0)
    out = jax.block_until_ready(out)

    # Pure-JAX reference mirroring the PyTorch broadcast semantics.
    ref = x * std.reshape(1, 3, 1, 1) + mean.reshape(1, 3, 1, 1)
    assert out.shape == x.shape and out.dtype == x.dtype
    assert jnp.allclose(out, ref, atol=1e-6, rtol=1e-6)

    print("KERNEL_OK")
</pallas_src>

<mosaic_0001>
module attributes {stable_mosaic.version = 11 : i64} {
  func.func @_unnormalize_kernel(%arg0: i32, %arg1: i32, %arg2: memref<6x1xf32, #tpu.memory_space<vmem>>, %arg3: memref<6x1xf32, #tpu.memory_space<vmem>>, %arg4: memref<6x256xf32, #tpu.memory_space<vmem>>, %arg5: memref<6x256xf32, #tpu.memory_space<vmem>>) attributes {dimension_semantics = [#tpu.dimension_semantics<parallel>, #tpu.dimension_semantics<parallel>], iteration_bounds = array<i64: 1, 1>, scalar_prefetch = 0 : i64, scratch_operands = 0 : i64, tpu.core_type = #tpu.core_type<tc>, window_params = [{transform_indices = @transform_0, window_bounds = array<i64: 6, 1>}, {transform_indices = @transform_1, window_bounds = array<i64: 6, 1>}, {transform_indices = @transform_2, window_bounds = array<i64: 6, 256>}, {transform_indices = @transform_3, window_bounds = array<i64: 6, 256>}]} {
    %c0 = arith.constant 0 : index
    %c0_0 = arith.constant 0 : index
    %0 = vector.load %arg4[%c0, %c0_0] : memref<6x256xf32, #tpu.memory_space<vmem>>, vector<6x256xf32>
    %c0_1 = arith.constant 0 : index
    %c0_2 = arith.constant 0 : index
    %1 = vector.load %arg2[%c0_1, %c0_2] : memref<6x1xf32, #tpu.memory_space<vmem>>, vector<6x1xf32>
    %2 = vector.broadcast %1 : vector<6x1xf32> to vector<6x256xf32>
    %3 = arith.mulf %0, %2 : vector<6x256xf32>
    %c0_3 = arith.constant 0 : index
    %c0_4 = arith.constant 0 : index
    %4 = vector.load %arg3[%c0_3, %c0_4] : memref<6x1xf32, #tpu.memory_space<vmem>>, vector<6x1xf32>
    %5 = vector.broadcast %4 : vector<6x1xf32> to vector<6x256xf32>
    %6 = arith.addf %3, %5 : vector<6x256xf32>
    %c0_5 = arith.constant 0 : index
    %c0_6 = arith.constant 0 : index
    %7 = vector.load %arg5[%c0_5, %c0_6] : memref<6x256xf32, #tpu.memory_space<vmem>>, vector<6x256xf32>
    tpu.vector_store %arg5[%c0_5, %c0_6], %6 {strides = array<i32>} : memref<6x256xf32, #tpu.memory_space<vmem>>, vector<6x256xf32>,
    return
  }
  func.func @transform_0(%arg0: i32, %arg1: i32) -> (i32, i32) {
    %c0_i32 = arith.constant 0 : i32
    %c0_i32_0 = arith.constant 0 : i32
    return %arg0, %c0_i32 : i32, i32
  }
  func.func @transform_1(%arg0: i32, %arg1: i32) -> (i32, i32) {
    %c0_i32 = arith.constant 0 : i32
    %c0_i32_0 = arith.constant 0 : i32
    return %arg0, %c0_i32 : i32, i32
  }
  func.func @transform_2(%arg0: i32, %arg1: i32) -> (i32, i32) {
    %c0_i32 = arith.constant 0 : i32
    return %arg0, %arg1 : i32, i32
  }
  func.func @transform_3(%arg0: i32, %arg1: i32) -> (i32, i32) {
    %c0_i32 = arith.constant 0 : i32
    return %arg0, %arg1 : i32, i32
  }
}

</mosaic_0001>

<llo_original>
// kernel: tpu_custom_call.1
$region0: #{tpu_custom_call.1}
  #allocation0 [shape = 'u32[]', space=smem, size = 0x4, offset = 0x4, fixed_abs, tag = 'smem constant byte address 0x4 - core index']
  #allocation1 [shape = 'u32[144,128]{1,0:T(1,128)}', space=vmem, size = 0x12000, scoped, tag = 'internal scratch']
  %s0 = inlined_call_operand.vmem [shape: f32[6,1], index: 0, kind: input, shape index: {}]
  %s1 = inlined_call_operand.vmem [shape: f32[6,1], index: 1, kind: input, shape index: {}]
  %s2 = inlined_call_operand.vmem [shape: f32[6,256], index: 2, kind: input, shape index: {}]
  %s3 = inlined_call_operand.hbm [shape: f32[6,256], index: 3, kind: output, shape index: {}]
  %s4 = sld [smem:[#allocation0]]
  $region22: #{tpu_custom_call.1} parent=0
    _
  %s6 = ssub.s32 1, %s4
  %s7 = scalar_select 0, %s6, %s4
  $region1: #{tpu_custom_call.1} parent=0
    #allocation2 [shape = 'u8[8192]{0}', space=vmem, size = 0x2000, scoped, tag = 'output window, operand 0, single buffered']
    #allocation3 [shape = 's32[1]{0}', space=sflag, size = 0x4, scoped, tag = 'scoped memory for tpu_custom_call.1']
    %8 = vsyncpa [#allocation3], 0
    // Predicated region
    $region2: #{tpu_custom_call.1} parent=1 // pred_check
      _
    $region3: #{tpu_custom_call.1} parent=1 // pred_check_branch
      %10 = sbr.rel (0) target = $region5
    $region4: #{tpu_custom_call.1} parent=1 // pred_region
      _
    $region5: #{tpu_custom_call.1} parent=1 // pred_fallthru
      _
    // Predicated region
    $region6: #{tpu_custom_call.1} parent=1 // pred_check
      _
    $region7: #{tpu_custom_call.1} parent=1 // pred_check_branch
      %12 = sbr.rel (0) target = $region9
    $region8: #{tpu_custom_call.1} parent=1 // pred_region
      _
    $region9: #{tpu_custom_call.1} parent=1 // pred_fallthru
      _
    // Predicated region
    $region10: #{tpu_custom_call.1} parent=1 // pred_check
      _
    $region11: #{tpu_custom_call.1} parent=1 // pred_check_branch
      %14 = sbr.rel (0) target = $region13
    $region12: #{tpu_custom_call.1} parent=1 // pred_region
      _
    $region13: #{tpu_custom_call.1} parent=1 // pred_fallthru
      _
    %v15 = vld [vmem:[%s2] sm:$0x3f]
    %v16 = vld [vmem:[%s2 + $0x8] sm:$0x3f]
    %v17 = vld [vmem:[%s0] sm:$0x3f]
    %19 = vset.pattern.permute.xlu0 0
    %20 = vperm.xlu0 %19, %v17
    %v21 = vpop.permute.xlu0 %20
    %v23 = vmul.f32 %v15, %v21
    %v24 = vmul.f32 %v16, %v21
    %v25 = vld [vmem:[%s1] sm:$0x3f]
    %27 = vset.pattern.permute.xlu0 0
    %28 = vperm.xlu0 %27, %v25
    %v29 = vpop.permute.xlu0 %28
    %v31 = vadd.f32 %v23, %v29
    %v32 = vadd.f32 %v24, %v29
    %33 = vst [vmem:[#allocation2] sm:$0x3f] %v31
    %34 = vst [vmem:[#allocation2 + $0x8] sm:$0x3f] %v32
    // Predicated region
    $region14: #{tpu_custom_call.1} parent=1 // pred_check
      _
    $region15: #{tpu_custom_call.1} parent=1 // pred_check_branch
      %36 = sbr.rel (0) target = $region17
    $region16: #{tpu_custom_call.1} parent=1 // pred_region
      %s38 = ssub.s32 256, 256
      %39 = vsyncadd [#allocation3], %s38
      %s41 = sshll.u32 [#allocation2], 4
      %s42 = int_to_ptr.vmem [resolvable:$true] %s41
      %44 = dma.vmem_to_hbm [thread:$0]  %s42, 256, %s3, [#allocation3]
    $region17: #{tpu_custom_call.1} parent=1 // pred_fallthru
      _
    // Predicated region
    $region18: #{tpu_custom_call.1} parent=1 // pred_check
      _
    $region19: #{tpu_custom_call.1} parent=1 // pred_check_branch
      %46 = sbr.rel (0) target = $region21
    $region20: #{tpu_custom_call.1} parent=1 // pred_region
      %47 = dma.done [#allocation3], 256
    $region21: #{tpu_custom_call.1} parent=1 // pred_fallthru
      _
    %48 = vsyncpa [#allocation3], 1

</llo_original>
